<compile_context>
chip_gen: v5e
topology: v5e:2x2
jax: 0.10.0
libtpu: 0.0.40
codegen_flags: <defaults>
</compile_context>

<pallas_src>
import jax
import jax.numpy as jnp
from jax.experimental import pallas as pl
from jax.experimental.pallas import tpu as pltpu


_LANE = 128                              # lane width: batch-tile granularity
_MAX_TB = 32768                          # hard cap on batch lanes per tile
_TILE_VMEM_BUDGET = 12 * 1024 * 1024     # 2 inputs x 2 buffers; fits v5e default


def _round_up(x: int, m: int) -> int:
    return ((x + m - 1) // m) * m


def _round_down(x: int, m: int) -> int:
    return (x // m) * m


def _cdiv(a: int, b: int) -> int:
    return (a + b - 1) // b


def _puremf_forward_kernel(u_ref, v_ref, out_ref):
    # u_ref / v_ref: (D, TB) -- latent dim on sublanes, batch on the lane axis.
    u = u_ref[...].astype(jnp.float32)      # free upcast if tables are bf16
    v = v_ref[...].astype(jnp.float32)
    # Reduce over the latent dim (axis 0) -> lane-dense (1, TB) scores; the
    # sublane add-tree (VPU) and exp (EUP) hide under the input DMA shadow.
    scores = jnp.sum(u * v, axis=0, keepdims=True)
    out_ref[...] = jax.nn.sigmoid(scores)   # self.f = nn.Sigmoid()


@jax.jit
def puremf_forward(user_table_t, item_table_t, users, items):
    """PureMF.forward: sigmoid(sum(user_emb * item_emb, dim=1)) -> (B,) f32.

    Args:
      user_table_t: (D, num_users)  embedding_user.weight, pre-transposed once.
      item_table_t: (D, num_items)  embedding_item.weight, pre-transposed once.
      users, items: (B,) integer ids.
    """
    users = users.astype(jnp.int32)   # users.long(); assumes < 2^31 table rows
    items = items.astype(jnp.int32)   # items.long()

    D = user_table_t.shape[0]
    B = users.shape[0]

    # Row-gather straight into the batch-on-lanes layout (XLA, fused under this
    # jit and eligible for input fusion into the pallas_call operands).
    # Note: jnp.take clips out-of-range ids instead of raising like nn.Embedding.
    u_t = jnp.take(user_table_t, users, axis=1)   # (D, B)
    v_t = jnp.take(item_table_t, items, axis=1)   # (D, B)

    # --- Batch (lane) tiling --------------------------------------------------
    itemsize = jnp.dtype(user_table_t.dtype).itemsize
    tb_cap = _TILE_VMEM_BUDGET // (4 * D * itemsize)        # 2 inputs x 2 bufs
    tb_cap = max(_LANE, min(_MAX_TB, _round_down(tb_cap, _LANE)))
    n_tiles = _cdiv(B, tb_cap)
    TB = _round_up(_cdiv(B, n_tiles), _LANE)                 # TB <= tb_cap
    Bp = n_tiles * TB                                        # < 128 pad / tile
    if Bp != B:
        pad = Bp - B
        u_t = jnp.pad(u_t, ((0, 0), (0, pad)))
        v_t = jnp.pad(v_t, ((0, 0), (0, pad)))

    out2d = pl.pallas_call(
        _puremf_forward_kernel,
        out_shape=jax.ShapeDtypeStruct((1, Bp), jnp.float32),
        grid=(n_tiles,),
        in_specs=[
            pl.BlockSpec((D, TB), lambda i: (0, i)),
            pl.BlockSpec((D, TB), lambda i: (0, i)),
        ],
        out_specs=pl.BlockSpec((1, TB), lambda i: (0, i)),
        compiler_params=pltpu.CompilerParams(
            dimension_semantics=("parallel",),
            vmem_limit_bytes=32 * 1024 * 1024,
            allow_input_fusion=[True, True],
        ),
    )(u_t, v_t)

    return out2d[0, :B]   # (B,) f32, matching PyTorch forward()


if __name__ == "__main__":
    key = jax.random.PRNGKey(0)
    k_u, k_i, k_uid, k_iid = jax.random.split(key, 4)

    # Small, forward-consistent shapes.
    num_users, num_items, latent_dim, batch = 64, 96, 32, 8

    # Deterministic N(0,1) init, matching PureMF.__init_weight.
    user_table = jax.random.normal(k_u, (num_users, latent_dim), dtype=jnp.float32)
    item_table = jax.random.normal(k_i, (num_items, latent_dim), dtype=jnp.float32)

    # One-time (outside the hot path) transpose to the (D, num_rows) layout so
    # the per-batch gather emits batch-on-lanes directly.
    user_table_t = jnp.asarray(user_table.T)
    item_table_t = jnp.asarray(item_table.T)

    users = jax.random.randint(k_uid, (batch,), 0, num_users, dtype=jnp.int32)
    items = jax.random.randint(k_iid, (batch,), 0, num_items, dtype=jnp.int32)

    out = puremf_forward(user_table_t, item_table_t, users, items)
    out = jax.block_until_ready(out)

    # Pure-JAX reference (mirrors the torch forward exactly).
    ref = jax.nn.sigmoid(jnp.sum(user_table[users] * item_table[items], axis=1))

    assert out.shape == (batch,), out.shape
    assert out.dtype == jnp.float32
    assert jnp.allclose(out, ref, atol=1e-6, rtol=1e-6), (out, ref)

    print("KERNEL_OK")
</pallas_src>

<mosaic_0001>
module attributes {stable_mosaic.version = 11 : i64} {
  func.func @_puremf_forward_kernel(%arg0: i32, %arg1: memref<32x128xf32, #tpu.memory_space<vmem>>, %arg2: memref<32x128xf32, #tpu.memory_space<vmem>>, %arg3: memref<1x128xf32, #tpu.memory_space<vmem>>) attributes {dimension_semantics = [#tpu.dimension_semantics<parallel>], iteration_bounds = array<i64: 1>, scalar_prefetch = 0 : i64, scratch_operands = 0 : i64, tpu.core_type = #tpu.core_type<tc>, window_params = [{transform_indices = @transform_0, window_bounds = array<i64: 32, 128>}, {transform_indices = @transform_1, window_bounds = array<i64: 32, 128>}, {transform_indices = @transform_2, window_bounds = array<i64: 1, 128>}]} {
    %c0 = arith.constant 0 : index
    %c0_0 = arith.constant 0 : index
    %0 = vector.load %arg1[%c0, %c0_0] : memref<32x128xf32, #tpu.memory_space<vmem>>, vector<32x128xf32>
    %c0_1 = arith.constant 0 : index
    %c0_2 = arith.constant 0 : index
    %1 = vector.load %arg2[%c0_1, %c0_2] : memref<32x128xf32, #tpu.memory_space<vmem>>, vector<32x128xf32>
    %2 = arith.mulf %0, %1 : vector<32x128xf32>
    %cst = arith.constant dense<0.000000e+00> : vector<128xf32>
    %3 = vector.multi_reduction <add>, %2, %cst [0] : vector<32x128xf32> to vector<128xf32>
    %4 = vector.shape_cast %3 : vector<128xf32> to vector<1x128xf32>
    %5 = arith.negf %4 : vector<1x128xf32>
    %6 = math.exp %5 : vector<1x128xf32>
    %cst_3 = arith.constant 1.000000e+00 : f32
    %7 = vector.broadcast %cst_3 : f32 to vector<1x128xf32>
    %8 = arith.addf %7, %6 : vector<1x128xf32>
    %9 = arith.divf %7, %8 : vector<1x128xf32>
    %c0_4 = arith.constant 0 : index
    %c0_5 = arith.constant 0 : index
    %10 = vector.load %arg3[%c0_4, %c0_5] : memref<1x128xf32, #tpu.memory_space<vmem>>, vector<1x128xf32>
    tpu.vector_store %arg3[%c0_4, %c0_5], %9 {strides = array<i32>} : memref<1x128xf32, #tpu.memory_space<vmem>>, vector<1x128xf32>,
    return
  }
  func.func @transform_0(%arg0: i32) -> (i32, i32) {
    %c0_i32 = arith.constant 0 : i32
    %c0_i32_0 = arith.constant 0 : i32
    return %c0_i32, %arg0 : i32, i32
  }
  func.func @transform_1(%arg0: i32) -> (i32, i32) {
    %c0_i32 = arith.constant 0 : i32
    %c0_i32_0 = arith.constant 0 : i32
    return %c0_i32, %arg0 : i32, i32
  }
  func.func @transform_2(%arg0: i32) -> (i32, i32) {
    %c0_i32 = arith.constant 0 : i32
    %c0_i32_0 = arith.constant 0 : i32
    return %c0_i32, %arg0 : i32, i32
  }
}

</mosaic_0001>

<llo_original>
// kernel: puremf_forward.2
$region0: #{puremf_forward.2}
  #allocation0 [shape = 'u32[]', space=smem, size = 0x4, offset = 0x4, fixed_abs, tag = 'smem constant byte address 0x4 - core index']
  #allocation1 [shape = 'u32[72,128]{1,0:T(1,128)}', space=vmem, size = 0x9000, scoped, tag = 'internal scratch']
  #allocation2 [shape = 'u32[2048]{0}', space=vmem, size = 0x2000, scoped, tag = 'scoped memory for puremf_forward.2']
  #allocation3 [shape = 'u32[2048]{0}', space=vmem, size = 0x2000, scoped, tag = 'scoped memory for puremf_forward.2']
  #allocation4 [shape = 'u32[2048]{0}', space=vmem, size = 0x2000, scoped, tag = 'scoped memory for puremf_forward.2']
  #allocation5 [shape = 'u32[2048]{0}', space=vmem, size = 0x2000, scoped, tag = 'scoped memory for puremf_forward.2']
  #allocation6 [shape = 'u32[2048]{0}', space=vmem, size = 0x2000, scoped, tag = 'scoped memory for puremf_forward.2']
  #allocation7 [shape = 'u32[2048]{0}', space=vmem, size = 0x2000, scoped, tag = 'scoped memory for puremf_forward.2']
  #allocation8 [shape = 'u32[2048]{0}', space=vmem, size = 0x2000, scoped, tag = 'scoped memory for puremf_forward.2']
  #allocation9 [shape = 'u32[2048]{0}', space=vmem, size = 0x2000, scoped, tag = 'scoped memory for puremf_forward.2']
  #allocation10 [shape = 'u32[2048]{0}', space=vmem, size = 0x2000, scoped, tag = 'scoped memory for puremf_forward.2']
  #allocation11 [shape = 'u32[2048]{0}', space=vmem, size = 0x2000, scoped, tag = 'scoped memory for puremf_forward.2']
  %s0 = inlined_call_operand.vmem [shape: f32[32,8], index: 0, kind: input, shape index: {}]
  %s1 = inlined_call_operand.<no memory space> [shape: f32[], index: 1, kind: input, shape index: {}]
  %s2 = inlined_call_operand.vmem [shape: f32[32,8], index: 2, kind: input, shape index: {}]
  %s3 = inlined_call_operand.vmem [shape: f32[1,128], index: 3, kind: output, shape index: {}]
  %s4 = sld [smem:[#allocation0]]
  $region18: #{puremf_forward.2} parent=0
    _
  %s6 = ssub.s32 1, %s4
  %s7 = scalar_select 0, %s6, %s4
  %v8 = vstv %s1
  %v9 = vstv %s1
  $region1: #{puremf_forward.2} parent=0
    #allocation12 [shape = 'u8[16384]{0}', space=vmem, size = 0x4000, dematerialized = true, scoped, tag = 'FusionAdapter Buffer %fusion.2 = f32[32,128]{1,0:T(8,128)} fusion(%param_2.3, %param_1.15), kind=kLoop, calls=%fused_computation.6.clone, metadata={op_name="jit(puremf_forward)/jit(_pad)/pad" stack_frame_id=3}']
    #allocation13 [shape = 'u8[16384]{0}', space=vmem, size = 0x4000, dematerialized = true, scoped, tag = 'FusionAdapter Buffer %fusion.1 = f32[32,128]{1,0:T(8,128)} fusion(%param_0.12, %param_1.15), kind=kLoop, calls=%fused_computation.5.clone, metadata={op_name="jit(puremf_forward)/jit(_pad)/pad" stack_frame_id=4}']
    // Predicated region
    $region2: #{puremf_forward.2} parent=1 // pred_check
      _
    $region3: #{puremf_forward.2} parent=1 // pred_check_branch
      %11 = sbr.rel (0) target = $region5
    $region4: #{puremf_forward.2} parent=1 // pred_region
      _
    $region5: #{puremf_forward.2} parent=1 // pred_fallthru
      _
    // Predicated region
    $region6: #{puremf_forward.2} parent=1 // pred_check
      _
    $region7: #{puremf_forward.2} parent=1 // pred_check_branch
      %13 = sbr.rel (0) target = $region9
    $region8: #{puremf_forward.2} parent=1 // pred_region
      _
    $region9: #{puremf_forward.2} parent=1 // pred_fallthru
      _
    %v14 = vld [vmem:[%s2] sm:$0xff]
    %v15 = vlaneseq
    %v16 = vand.u32 %v15, 127
    %vm18 = vcmp.lt.s32.totalorder %v16, 8
    %v19 = vsel %vm18, %v14, %v8
    %s21 = ssub.s32 256, 1
    %22 = vst [vmem:[#allocation12] sm:%s21] %v19
    %s23 = scalar_lea.vmem %s2, 8
    %v24 = vld [vmem:[%s23] sm:$0xff]
    %v25 = vlaneseq
    %v26 = vand.u32 %v25, 127
    %vm28 = vcmp.lt.s32.totalorder %v26, 8
    %v29 = vsel %vm28, %v24, %v8
    %s30 = scalar_lea.vmem [#allocation12], 8
    %s32 = ssub.s32 256, 1
    %33 = vst [vmem:[%s30] sm:%s32] %v29
    %s34 = scalar_lea.vmem %s2, 16
    %v35 = vld [vmem:[%s34] sm:$0xff]
    %v36 = vlaneseq
    %v37 = vand.u32 %v36, 127
    %vm39 = vcmp.lt.s32.totalorder %v37, 8
    %v40 = vsel %vm39, %v35, %v8
    %s41 = scalar_lea.vmem [#allocation12], 16
    %s43 = ssub.s32 256, 1
    %44 = vst [vmem:[%s41] sm:%s43] %v40
    %s45 = scalar_lea.vmem %s2, 24
    %v46 = vld [vmem:[%s45] sm:$0xff]
    %v47 = vlaneseq
    %v48 = vand.u32 %v47, 127
    %vm50 = vcmp.lt.s32.totalorder %v48, 8
    %v51 = vsel %vm50, %v46, %v8
    %s52 = scalar_lea.vmem [#allocation12], 24
    %s54 = ssub.s32 256, 1
    %55 = vst [vmem:[%s52] sm:%s54] %v51
    %v56 = vld [vmem:[%s0] sm:$0xff]
    %v57 = vlaneseq
    %v58 = vand.u32 %v57, 127
    %vm60 = vcmp.lt.s32.totalorder %v58, 8
    %v61 = vsel %vm60, %v56, %v9
    %s63 = ssub.s32 256, 1
    %64 = vst [vmem:[#allocation13] sm:%s63] %v61
    %s65 = scalar_lea.vmem %s0, 8
    %v66 = vld [vmem:[%s65] sm:$0xff]
    %v67 = vlaneseq
    %v68 = vand.u32 %v67, 127
    %vm70 = vcmp.lt.s32.totalorder %v68, 8
    %v71 = vsel %vm70, %v66, %v9
    %s72 = scalar_lea.vmem [#allocation13], 8
    %s74 = ssub.s32 256, 1
    %75 = vst [vmem:[%s72] sm:%s74] %v71
    %s76 = scalar_lea.vmem %s0, 16
    %v77 = vld [vmem:[%s76] sm:$0xff]
    %v78 = vlaneseq
    %v79 = vand.u32 %v78, 127
    %vm81 = vcmp.lt.s32.totalorder %v79, 8
    %v82 = vsel %vm81, %v77, %v9
    %s83 = scalar_lea.vmem [#allocation13], 16
    %s85 = ssub.s32 256, 1
    %86 = vst [vmem:[%s83] sm:%s85] %v82
    %s87 = scalar_lea.vmem %s0, 24
    %v88 = vld [vmem:[%s87] sm:$0xff]
    %v89 = vlaneseq
    %v90 = vand.u32 %v89, 127
    %vm92 = vcmp.lt.s32.totalorder %v90, 8
    %v93 = vsel %vm92, %v88, %v9
    %s94 = scalar_lea.vmem [#allocation13], 24
    %s96 = ssub.s32 256, 1
    %97 = vst [vmem:[%s94] sm:%s96] %v93
    %v98 = vld [vmem:[#allocation12] sm:$0xff]
    %v99 = vld [vmem:[#allocation12 + $0x8] sm:$0xff]
    %v100 = vld [vmem:[#allocation12 + $0x10] sm:$0xff]
    %v101 = vld [vmem:[#allocation12 + $0x18] sm:$0xff]
    %v102 = vld [vmem:[#allocation13] sm:$0xff]
    %v103 = vld [vmem:[#allocation13 + $0x8] sm:$0xff]
    %v104 = vld [vmem:[#allocation13 + $0x10] sm:$0xff]
    %v105 = vld [vmem:[#allocation13 + $0x18] sm:$0xff]
    %v106 = vmul.f32 %v98, %v102
    %v107 = vmul.f32 %v99, %v103
    %v108 = vmul.f32 %v100, %v104
    %v109 = vmul.f32 %v101, %v105
    %v110 = vadd.f32 %v106, %v107
    %v111 = vadd.f32 %v110, %v108
    %v112 = vadd.f32 %v111, %v109
    %v113 = vrot.slane %v112, 4
    %v114 = vadd.f32 %v112, %v113
    %v115 = vrot.slane %v114, 2
    %v116 = vadd.f32 %v114, %v115
    %v117 = vrot.slane %v116, 1
    %v118 = vadd.f32 %v116, %v117
    %v119 = vxor.u32 %v118, 2147483648
    %v120 = vmul.f32 %v119, 1.442695
    %v121 = vpow.pop %v120
    %v122 = vadd.f32 %v121, 1.0
    %v123 = vrcp.pop %v122
    %v124 = vmul.f32 %v122, %v123
    %v125 = vsub.f32 1.0, %v124
    %v126 = vmul.f32 %v123, %v125
    %v127 = vadd.f32 %v123, %v126
    %vm128 = vweird.f32 %v122
    %vm129 = vweird.f32 %v123
    %vm130 = vmor %vm128, %vm129
    %v131 = vsel %vm130, %v123, %v127
    %v132 = vand.u32 2147483647, %v122
    %vm133 = vcmp.eq.f32.partialorder %v132, 8.507059e+37
    %v134 = vand.u32 %v122, 2147483648
    %v135 = vor.u32 1.1754944e-38, %v134
    %v136 = vsel %vm133, %v135, %v131
    %v137 = vmul.f32 1.0, %v136
    %138 = vst [vmem:[%s3] sm:$0x1] %v137
    // Predicated region
    $region10: #{puremf_forward.2} parent=1 // pred_check
      _
    $region11: #{puremf_forward.2} parent=1 // pred_check_branch
      %140 = sbr.rel (0) target = $region13
    $region12: #{puremf_forward.2} parent=1 // pred_region
      _
    $region13: #{puremf_forward.2} parent=1 // pred_fallthru
      _
    // Predicated region
    $region14: #{puremf_forward.2} parent=1 // pred_check
      _
    $region15: #{puremf_forward.2} parent=1 // pred_check_branch
      %142 = sbr.rel (0) target = $region17
    $region16: #{puremf_forward.2} parent=1 // pred_region
      _
    $region17: #{puremf_forward.2} parent=1 // pred_fallthru
      _

</llo_original>
